<compile_context>
chip_gen: v6e
topology: v6e:2x2x1
jax: 0.10.0
libtpu: 0.0.40
codegen_flags: <defaults>
</compile_context>

<pallas_src>
import math
from functools import partial

import jax
import jax.numpy as jnp
from jax.experimental import pallas as pl
from jax.experimental.pallas import tpu as pltpu


# --------------------------------------------------------------------------
# Tiling helpers
# --------------------------------------------------------------------------

_VMEM_LIMIT = 48 * 1024 * 1024     # <= v7x physical (64 MiB); fine on v5e/v6e
_BLOCK_BUDGET = 4 << 20            # bytes of per-step working set per kernel
_ROW_CAP = 2048

_CPARAMS = pltpu.CompilerParams(
    dimension_semantics=("parallel",),
    vmem_limit_bytes=_VMEM_LIMIT,
)


def _pad128(c):
    """VMEM lane padding: minor dim rounds up to 128."""
    return ((c + 127) // 128) * 128


def _pick_tile(R, per_row_bytes):
    """Largest row tile that divides R, is a multiple of 8 (prefer 16 for bf16
    sublane packing), keeps the per-step working set under _BLOCK_BUDGET, and
    leaves >= 2 grid steps so both v7x TensorCores get work."""
    if R % 8 != 0:
        return R                    # full-array block: no (8,128) constraint
    limit = min(_ROW_CAP, max(8, _BLOCK_BUDGET // max(per_row_bytes, 1)))
    if R >= 16:
        limit = min(limit, R // 2)  # >= 2 grid steps (v7x dual TC)
    limit = max(limit, 8)
    best8, best16 = 8, 0
    t = 8
    while t <= limit:
        if R % t == 0:
            best8 = t
            if t % 16 == 0:
                best16 = t
        t += 8
    return best16 if best16 >= 16 else best8


def _vec(v, n):
    return v.reshape(1, n).astype(jnp.float32)


# --------------------------------------------------------------------------
# Pallas kernels
# --------------------------------------------------------------------------

def _pointwise_kernel(act, has_post, *refs):
    """1x1 conv / linear: y = post_affine(act(x @ W_eff + b_eff)).
    W_eff has the BN scale folded in; b_eff = b*scale + shift.
    Input is cast to bf16 IN VMEM (no XLA-side cast pass over HBM)."""
    if has_post:
        x_ref, w_ref, b_ref, qs_ref, qb_ref, o_ref = refs
    else:
        x_ref, w_ref, b_ref, o_ref = refs
    x = x_ref[...].astype(jnp.bfloat16)
    y = jnp.dot(x, w_ref[...], preferred_element_type=jnp.float32) + b_ref[...]
    if act == "relu":
        y = jnp.maximum(y, 0.0)
    elif act == "leaky01":          # nn.LeakyReLU() default slope
        y = jnp.where(y > 0, y, 0.01 * y)
    elif act == "leaky02":
        y = jnp.where(y > 0, y, 0.2 * y)
    if has_post:                    # fc0 path: activation -> BatchNorm1d
        y = y * qs_ref[...] + qb_ref[...]
    o_ref[...] = y.astype(o_ref.dtype)


def _dual_pointwise_kernel(x1_ref, x2_ref, w1_ref, w2_ref, b_ref, o_ref):
    """ReLU(BN(Conv1x1(cat([x1, x2], channel)))) with split weights: the
    concatenated decoder activation is never materialized in HBM."""
    y = (jnp.dot(x1_ref[...].astype(jnp.bfloat16), w1_ref[...],
                 preferred_element_type=jnp.float32)
         + jnp.dot(x2_ref[...].astype(jnp.bfloat16), w2_ref[...],
                   preferred_element_type=jnp.float32)
         + b_ref[...])
    o_ref[...] = jnp.maximum(y, 0.0).astype(o_ref.dtype)


def _head_kernel(x_ref, w1_ref, b1_ref, w2_ref, b2_ref, w3_ref, b3_ref, o_ref):
    """fc1 -> fc2 -> (dropout = identity) -> fc3 fused in one kernel."""
    y = jnp.dot(x_ref[...].astype(jnp.bfloat16), w1_ref[...],
                preferred_element_type=jnp.float32) + b1_ref[...]
    y = jnp.maximum(y, 0.0)
    y = jnp.dot(y.astype(jnp.bfloat16), w2_ref[...],
                preferred_element_type=jnp.float32) + b2_ref[...]
    y = jnp.maximum(y, 0.0)
    # TODO(synk): nn.Dropout(0.5) -- inference mode, identity pass-through.
    y = jnp.dot(y.astype(jnp.bfloat16), w3_ref[...],
                preferred_element_type=jnp.float32) + b3_ref[...]
    o_ref[...] = y.astype(o_ref.dtype)


def _attention_agg(fn, fx, wnn, wxn, wnx, wxx):
    """Att_pooling core over the implicit concat [f_neigh | f_xyz]:
    fc scores -> softmax over K -> per-channel weighted sum over K.
    fn/fx: (tr, K, C*) bf16.  Returns f32 (tr, Cn), (tr, Cx)."""
    tr, K, Cn = fn.shape
    Cx = fx.shape[2]
    fn2 = fn.reshape(tr * K, Cn)
    fx2 = fx.reshape(tr * K, Cx)
    att_n = (jnp.dot(fn2, wnn, preferred_element_type=jnp.float32)
             + jnp.dot(fx2, wxn, preferred_element_type=jnp.float32)
             ).reshape(tr, K, Cn)
    att_x = (jnp.dot(fn2, wnx, preferred_element_type=jnp.float32)
             + jnp.dot(fx2, wxx, preferred_element_type=jnp.float32)
             ).reshape(tr, K, Cx)
    # softmax over K (dim=3 in NCHW), independently per output channel
    att_n = jnp.exp(att_n - jnp.max(att_n, axis=1, keepdims=True))
    att_n = att_n * pl.reciprocal(jnp.sum(att_n, axis=1, keepdims=True),
                                  approx=True)
    att_x = jnp.exp(att_x - jnp.max(att_x, axis=1, keepdims=True))
    att_x = att_x * pl.reciprocal(jnp.sum(att_x, axis=1, keepdims=True),
                                  approx=True)
    agg_n = jnp.sum(fn.astype(jnp.float32) * att_n, axis=1)    # (tr, Cn)
    agg_x = jnp.sum(fx.astype(jnp.float32) * att_x, axis=1)    # (tr, Cx)
    return agg_n, agg_x


def _bblock1_kernel(nx_ref, xyz_ref, fn_ref,
                    w10_ref, b10_ref,
                    wnn_ref, wxn_ref, wnx_ref, wxx_ref,
                    wmn_ref, wmx_ref, bm_ref,
                    w2_ref, b2_ref,
                    agg_ref, fx2_ref):
    """Fused Building_block stage 1:
      relative_pos_encoding -> mlp1 -> Att_pooling_1 -> mlp2
    The (tr,K,10) rel-pos tensor and the (tr,K,C/2) mlp1 output live only in
    VMEM/vregs.  Outputs: f_pc_agg (tr,C/2) and mlp2(f_xyz) (tr,K,C/2)."""
    tr, K, C2 = fn_ref.shape
    neigh = nx_ref[...].astype(jnp.float32)                   # (tr, K, 3)
    xz = xyz_ref[...].astype(jnp.float32)                     # (tr, 1, 3)
    rel = xz - neigh                                          # (tr, K, 3)
    dis = jnp.sqrt(jnp.sum(rel * rel, axis=-1, keepdims=True))  # (tr, K, 1)
    # 10-channel rel-pos "1x1 conv" as VPU broadcast-FMAs (channels:
    # [dis, rel_xyz, xyz_tile, neighbor_xyz]); avoids tiny-K MXU contractions
    # and never materializes the 10-channel tensor.
    w10 = w10_ref[...]                                        # (10, C2) f32
    y = dis * w10[0:1, :] + b10_ref[...]
    for c in range(3):
        y = y + rel[:, :, c:c + 1] * w10[1 + c:2 + c, :]
        y = y + xz[:, :, c:c + 1] * w10[4 + c:5 + c, :]
        y = y + neigh[:, :, c:c + 1] * w10[7 + c:8 + c, :]
    fx1 = jnp.maximum(y, 0.0)                                 # mlp1 out, f32
    fx1_b = fx1.astype(jnp.bfloat16)
    fn = fn_ref[...].astype(jnp.bfloat16)

    # Att_pooling_1 over implicit [f_neigh | f_xyz]
    agg_n, agg_x = _attention_agg(fn, fx1_b, wnn_ref[...], wxn_ref[...],
                                  wnx_ref[...], wxx_ref[...])
    f_agg = (jnp.dot(agg_n.astype(jnp.bfloat16), wmn_ref[...],
                     preferred_element_type=jnp.float32)
             + jnp.dot(agg_x.astype(jnp.bfloat16), wmx_ref[...],
                       preferred_element_type=jnp.float32)
             + bm_ref[...])
    agg_ref[...] = jnp.maximum(f_agg, 0.0).astype(agg_ref.dtype)

    # Building_block mlp2 on f_xyz
    fx2 = (jnp.dot(fx1_b.reshape(tr * K, C2), w2_ref[...],
                   preferred_element_type=jnp.float32) + b2_ref[...])
    fx2_ref[...] = jnp.maximum(fx2, 0.0).reshape(tr, K, C2).astype(fx2_ref.dtype)


def _bblock2_tail_kernel(fn_ref, fx_ref, feat_ref,
                         wnn_ref, wxn_ref, wnx_ref, wxx_ref,
                         wmn_ref, wmx_ref, bm_ref,
                         w2_ref, b2_ref, ws_ref, bs_ref, o_ref):
    """Fused Building_block stage 2 + Dilated_res_block tail:
      Att_pooling_2 -> drb.mlp2 ; shortcut(feature) ; add ; LeakyReLU(0.2)."""
    fn = fn_ref[...].astype(jnp.bfloat16)
    fx = fx_ref[...].astype(jnp.bfloat16)
    agg_n, agg_x = _attention_agg(fn, fx, wnn_ref[...], wxn_ref[...],
                                  wnx_ref[...], wxx_ref[...])
    f_agg = (jnp.dot(agg_n.astype(jnp.bfloat16), wmn_ref[...],
                     preferred_element_type=jnp.float32)
             + jnp.dot(agg_x.astype(jnp.bfloat16), wmx_ref[...],
                       preferred_element_type=jnp.float32)
             + bm_ref[...])
    f_pc = jnp.maximum(f_agg, 0.0)                            # lfa output
    y = jnp.dot(f_pc.astype(jnp.bfloat16), w2_ref[...],
                preferred_element_type=jnp.float32) + b2_ref[...]
    z = jnp.dot(feat_ref[...].astype(jnp.bfloat16), ws_ref[...],
                preferred_element_type=jnp.float32) + bs_ref[...]
    r = y + z
    o_ref[...] = jnp.where(r > 0, r, 0.2 * r).astype(o_ref.dtype)


def _max_over_k_kernel(x_ref, o_ref):
    """random_sample max-pool over the K neighbor axis."""
    o_ref[...] = jnp.max(x_ref[...], axis=1).astype(o_ref.dtype)


# --------------------------------------------------------------------------
# Pallas wrappers
# --------------------------------------------------------------------------

def pointwise_conv(x2d, W, b, act="none", post=None, out_dtype=jnp.bfloat16):
    R, Cin = x2d.shape
    Cout = W.shape[1]
    row_bytes = _pad128(Cin) * x2d.dtype.itemsize + _pad128(Cout) * 6
    tr = _pick_tile(R, row_bytes)
    has_post = post is not None
    args = [x2d, W.astype(jnp.bfloat16), _vec(b, Cout)]
    in_specs = [
        pl.BlockSpec((tr, Cin), lambda i: (i, 0)),
        pl.BlockSpec((Cin, Cout), lambda i: (0, 0)),
        pl.BlockSpec((1, Cout), lambda i: (0, 0)),
    ]
    if has_post:
        qs, qb = post
        args += [_vec(qs, Cout), _vec(qb, Cout)]
        in_specs += [pl.BlockSpec((1, Cout), lambda i: (0, 0)),
                     pl.BlockSpec((1, Cout), lambda i: (0, 0))]
    return pl.pallas_call(
        partial(_pointwise_kernel, act, has_post),
        out_shape=jax.ShapeDtypeStruct((R, Cout), out_dtype),
        grid=(R // tr,),
        in_specs=in_specs,
        out_specs=pl.BlockSpec((tr, Cout), lambda i: (i, 0)),
        compiler_params=_CPARAMS,
    )(*args)


def dual_pointwise_conv(x1, x2, p, out_dtype=jnp.bfloat16):
    """ReLU(BN(Conv1x1(cat([x1, x2], channel)))) without materializing the cat."""
    lead = x1.shape[:-1]
    R = math.prod(lead)
    C1, C2c = x1.shape[-1], x2.shape[-1]
    Weff, beff = fold_bn(p)
    Cout = Weff.shape[1]
    row_bytes = (_pad128(C1) + _pad128(C2c)) * 2 + _pad128(Cout) * 6
    tr = _pick_tile(R, row_bytes)
    out = pl.pallas_call(
        _dual_pointwise_kernel,
        out_shape=jax.ShapeDtypeStruct((R, Cout), out_dtype),
        grid=(R // tr,),
        in_specs=[
            pl.BlockSpec((tr, C1), lambda i: (i, 0)),
            pl.BlockSpec((tr, C2c), lambda i: (i, 0)),
            pl.BlockSpec((C1, Cout), lambda i: (0, 0)),
            pl.BlockSpec((C2c, Cout), lambda i: (0, 0)),
            pl.BlockSpec((1, Cout), lambda i: (0, 0)),
        ],
        out_specs=pl.BlockSpec((tr, Cout), lambda i: (i, 0)),
        compiler_params=_CPARAMS,
    )(x1.reshape(R, C1), x2.reshape(R, C2c), Weff[:C1], Weff[C1:],
      _vec(beff, Cout))
    return out.reshape(*lead, Cout)


def classification_head(x, p1, p2, p3):
    """Fused fc1 -> fc2 -> dropout(identity) -> fc3; returns f32 logits."""
    lead = x.shape[:-1]
    R = math.prod(lead)
    Cin = x.shape[-1]
    W1, b1 = fold_bn(p1)
    W2, b2 = fold_bn(p2)
    W3, b3 = fold_bn(p3)
    C1, C2c, C3 = W1.shape[1], W2.shape[1], W3.shape[1]
    row_bytes = (_pad128(Cin) * 2 + (_pad128(C1) + _pad128(C2c)) * 4
                 + _pad128(C3) * 8)
    tr = _pick_tile(R, row_bytes)
    out = pl.pallas_call(
        _head_kernel,
        out_shape=jax.ShapeDtypeStruct((R, C3), jnp.float32),
        grid=(R // tr,),
        in_specs=[
            pl.BlockSpec((tr, Cin), lambda i: (i, 0)),
            pl.BlockSpec((Cin, C1), lambda i: (0, 0)),
            pl.BlockSpec((1, C1), lambda i: (0, 0)),
            pl.BlockSpec((C1, C2c), lambda i: (0, 0)),
            pl.BlockSpec((1, C2c), lambda i: (0, 0)),
            pl.BlockSpec((C2c, C3), lambda i: (0, 0)),
            pl.BlockSpec((1, C3), lambda i: (0, 0)),
        ],
        out_specs=pl.BlockSpec((tr, C3), lambda i: (i, 0)),
        compiler_params=_CPARAMS,
    )(x.reshape(R, Cin), W1, _vec(b1, C1), W2, _vec(b2, C2c), W3, _vec(b3, C3))
    return out.reshape(*lead, C3)


def bblock_stage1(xyz, neigh_xyz, f_neigh1, lfa):
    """Fused rel-pos-encoding + mlp1 + Att_pooling_1 + mlp2."""
    B, N, K, C2 = f_neigh1.shape
    R = B * N
    w10, b10 = fold_bn(lfa["mlp1"], dtype=jnp.float32)        # (10, C2)
    a1 = lfa["att1"]
    Wfc = a1["Wfc"].astype(jnp.float32)                       # (2C2, 2C2)
    Wm = a1["W"] * a1["scale"][None, :]                       # (2C2, Cm)
    bm = a1["b"] * a1["scale"] + a1["shift"]
    Cm = Wm.shape[1]
    w2, b2 = fold_bn(lfa["mlp2"])                             # (C2, C2)
    bf16 = lambda m: m.astype(jnp.bfloat16)
    wnn, wnx = bf16(Wfc[:C2, :C2]), bf16(Wfc[:C2, C2:])
    wxn, wxx = bf16(Wfc[C2:, :C2]), bf16(Wfc[C2:, C2:])
    wmn, wmx = bf16(Wm[:C2, :]), bf16(Wm[C2:, :])

    nx = neigh_xyz.reshape(R, K, 3)
    xz = xyz.reshape(R, 1, 3)
    fn = f_neigh1.reshape(R, K, C2)
    row_bytes = (K * 128 * 4 + 128 * 4 + 2 * K * _pad128(C2) * 2
                 + _pad128(Cm) * 2 + 6 * K * _pad128(C2) * 4)
    tr = _pick_tile(R, row_bytes)
    agg, fx2 = pl.pallas_call(
        _bblock1_kernel,
        out_shape=(jax.ShapeDtypeStruct((R, Cm), jnp.bfloat16),
                   jax.ShapeDtypeStruct((R, K, C2), jnp.bfloat16)),
        grid=(R // tr,),
        in_specs=[
            pl.BlockSpec((tr, K, 3), lambda i: (i, 0, 0)),
            pl.BlockSpec((tr, 1, 3), lambda i: (i, 0, 0)),
            pl.BlockSpec((tr, K, C2), lambda i: (i, 0, 0)),
            pl.BlockSpec((10, C2), lambda i: (0, 0)),
            pl.BlockSpec((1, C2), lambda i: (0, 0)),
            pl.BlockSpec((C2, C2), lambda i: (0, 0)),
            pl.BlockSpec((C2, C2), lambda i: (0, 0)),
            pl.BlockSpec((C2, C2), lambda i: (0, 0)),
            pl.BlockSpec((C2, C2), lambda i: (0, 0)),
            pl.BlockSpec((C2, Cm), lambda i: (0, 0)),
            pl.BlockSpec((C2, Cm), lambda i: (0, 0)),
            pl.BlockSpec((1, Cm), lambda i: (0, 0)),
            pl.BlockSpec((C2, C2), lambda i: (0, 0)),
            pl.BlockSpec((1, C2), lambda i: (0, 0)),
        ],
        out_specs=(pl.BlockSpec((tr, Cm), lambda i: (i, 0)),
                   pl.BlockSpec((tr, K, C2), lambda i: (i, 0, 0))),
        compiler_params=_CPARAMS,
    )(nx, xz, fn, w10, _vec(b10, C2), wnn, wxn, wnx, wxx,
      wmn, wmx, _vec(bm, Cm), w2, _vec(b2, C2))
    return agg.reshape(B, N, Cm), fx2.reshape(B, N, K, C2)


def bblock_stage2_tail(f_neigh2, f_xyz2, feature, att2, p_mlp2, p_short):
    """Fused Att_pooling_2 + DRB mlp2 + shortcut + residual + LeakyReLU(0.2)."""
    B, N, K, C2 = f_neigh2.shape
    d_in = feature.shape[-1]
    R = B * N
    Wfc = att2["Wfc"].astype(jnp.float32)                     # (2C2, 2C2)
    Wm = att2["W"] * att2["scale"][None, :]                   # (2C2, d_out)
    bm = att2["b"] * att2["scale"] + att2["shift"]
    d_out = Wm.shape[1]
    w2, b2 = fold_bn(p_mlp2)                                  # (d_out, 2*d_out)
    ws, bs = fold_bn(p_short)                                 # (d_in,  2*d_out)
    Cout = w2.shape[1]
    bf16 = lambda m: m.astype(jnp.bfloat16)
    wnn, wnx = bf16(Wfc[:C2, :C2]), bf16(Wfc[:C2, C2:])
    wxn, wxx = bf16(Wfc[C2:, :C2]), bf16(Wfc[C2:, C2:])
    wmn, wmx = bf16(Wm[:C2, :]), bf16(Wm[C2:, :])

    fn = f_neigh2.reshape(R, K, C2)
    fx = f_xyz2.reshape(R, K, C2)
    ft = feature.reshape(R, d_in)
    row_bytes = (2 * K * _pad128(C2) * 2 + _pad128(d_in) * ft.dtype.itemsize
                 + _pad128(Cout) * 6 + 6 * K * _pad128(C2) * 4)
    tr = _pick_tile(R, row_bytes)
    out = pl.pallas_call(
        _bblock2_tail_kernel,
        out_shape=jax.ShapeDtypeStruct((R, Cout), jnp.bfloat16),
        grid=(R // tr,),
        in_specs=[
            pl.BlockSpec((tr, K, C2), lambda i: (i, 0, 0)),
            pl.BlockSpec((tr, K, C2), lambda i: (i, 0, 0)),
            pl.BlockSpec((tr, d_in), lambda i: (i, 0)),
            pl.BlockSpec((C2, C2), lambda i: (0, 0)),
            pl.BlockSpec((C2, C2), lambda i: (0, 0)),
            pl.BlockSpec((C2, C2), lambda i: (0, 0)),
            pl.BlockSpec((C2, C2), lambda i: (0, 0)),
            pl.BlockSpec((C2, d_out), lambda i: (0, 0)),
            pl.BlockSpec((C2, d_out), lambda i: (0, 0)),
            pl.BlockSpec((1, d_out), lambda i: (0, 0)),
            pl.BlockSpec((d_out, Cout), lambda i: (0, 0)),
            pl.BlockSpec((1, Cout), lambda i: (0, 0)),
            pl.BlockSpec((d_in, Cout), lambda i: (0, 0)),
            pl.BlockSpec((1, Cout), lambda i: (0, 0)),
        ],
        out_specs=pl.BlockSpec((tr, Cout), lambda i: (i, 0)),
        compiler_params=_CPARAMS,
    )(fn, fx, ft, wnn, wxn, wnx, wxx, wmn, wmx, _vec(bm, d_out),
      w2, _vec(b2, Cout), ws, _vec(bs, Cout))
    return out.reshape(B, N, Cout)


def max_over_k(x):
    R, K, C = x.shape
    row_bytes = K * _pad128(C) * x.dtype.itemsize + _pad128(C) * 4
    tr = _pick_tile(R, row_bytes)
    return pl.pallas_call(
        _max_over_k_kernel,
        out_shape=jax.ShapeDtypeStruct((R, C), x.dtype),
        grid=(R // tr,),
        in_specs=[pl.BlockSpec((tr, K, C), lambda i: (i, 0, 0))],
        out_specs=pl.BlockSpec((tr, C), lambda i: (i, 0)),
        compiler_params=_CPARAMS,
    )(x)


# --------------------------------------------------------------------------
# Model glue (data-dependent gathers stay in plain JAX)
# --------------------------------------------------------------------------

def fold_bn(p, dtype=jnp.bfloat16):
    """Fold (conv bias + BN scale/shift) into effective weight + f32 bias."""
    W_eff = (p["W"] * p["scale"][None, :]).astype(dtype)
    b_eff = (p["b"] * p["scale"] + p["shift"]).astype(jnp.float32)
    return W_eff, b_eff


def conv2d_bn(x, p, act="relu", out_dtype=jnp.bfloat16):
    """pt_utils.Conv2d (1x1) + BN + activation on a channels-last tensor."""
    lead = x.shape[:-1]
    R = math.prod(lead)
    W, b = fold_bn(p)
    y = pointwise_conv(x.reshape(R, x.shape[-1]), W, b, act=act,
                       out_dtype=out_dtype)
    return y.reshape(*lead, -1)


def gather_neighbour(pc, idx):
    # pc: (B, N, C), idx: (B, M, K) -> (B, M, K, C)
    # TODO(synk): fuse this data-dependent row gather into the Pallas kernels
    # (scalar-prefetched indices + in-kernel DMA) to drop the (B,M,K,C) HBM
    # intermediate; kept as an XLA gather for guaranteed lowering.
    B, N, C = pc.shape
    M, K = idx.shape[1], idx.shape[2]
    flat = idx.reshape(B, M * K, 1).astype(jnp.int32)
    g = jnp.take_along_axis(pc, flat, axis=1)
    return g.reshape(B, M, K, C)


def dilated_res_block(p, feature, xyz, neigh_idx):
    f_pc = conv2d_bn(feature, p["mlp1"], act="relu")              # (B,N,C/2)
    lfa = p["lfa"]
    neigh_xyz = gather_neighbour(xyz, neigh_idx)                  # (B,N,K,3) f32
    f_neigh1 = gather_neighbour(f_pc, neigh_idx)                  # (B,N,K,C/2)
    f_agg1, f_xyz2 = bblock_stage1(xyz, neigh_xyz, f_neigh1, lfa)
    f_neigh2 = gather_neighbour(f_agg1, neigh_idx)                # (B,N,K,C/2)
    return bblock_stage2_tail(f_neigh2, f_xyz2, feature,
                              lfa["att2"], p["mlp2"], p["shortcut"])


def random_sample(feature, pool_idx):
    # feature: (B, N, C), pool_idx: (B, Np, K) -> (B, Np, C) via max over K
    # TODO(synk): pool gather could be fused into _max_over_k_kernel via
    # scalar-prefetched indices; kept as an XLA gather.
    B, N, C = feature.shape
    Np, K = pool_idx.shape[1], pool_idx.shape[2]
    idx = pool_idx.reshape(B, Np * K, 1).astype(jnp.int32)
    g = jnp.take_along_axis(feature, idx, axis=1).reshape(B * Np, K, C)
    return max_over_k(g).reshape(B, Np, C)


def nearest_interpolation(feature, interp_idx):
    # feature: (B, Ns, C), interp_idx: (B, Nb, 1) -> (B, Nb, C)
    idx = interp_idx.astype(jnp.int32)
    return jnp.take_along_axis(feature, idx, axis=1)


def network_forward(params, cfg, end_points):
    feats = end_points["features"]                                # (B, N0, 6)
    B, N0, _ = feats.shape
    p0 = params["fc0"]
    # fc0 -> LeakyReLU(0.01) -> BatchNorm1d (post-activation affine)
    x = pointwise_conv(feats.reshape(B * N0, 6), p0["W"], p0["b"],
                       act="leaky01", post=(p0["bn_scale"], p0["bn_shift"]))
    features = x.reshape(B, N0, 8)

    f_encoder_list = []
    for i in range(cfg["num_layers"]):
        f_enc = dilated_res_block(params["drb"][i], features,
                                  end_points["xyz"][i],
                                  end_points["neigh_idx"][i])
        f_sampled = random_sample(f_enc, end_points["sub_idx"][i])
        features = f_sampled
        if i == 0:
            f_encoder_list.append(f_enc)
        f_encoder_list.append(f_sampled)

    features = conv2d_bn(f_encoder_list[-1], params["decoder_0"], act="relu")
    for j in range(cfg["num_layers"]):
        interp = nearest_interpolation(features,
                                       end_points["interp_idx"][-j - 1])
        # cat([skip, interp], channel) -> conv, without materializing the cat
        features = dual_pointwise_conv(f_encoder_list[-j - 2], interp,
                                       params["dec"][j])

    logits = classification_head(features, params["fc1"], params["fc2"],
                                 params["fc3"])                   # (B, N0, nc)
    # TODO(synk): lane-dense (C, R) output layout would avoid masked stores for
    # C<128; kept channels-last for clarity/correctness.
    return jnp.transpose(logits, (0, 2, 1))                       # (B, nc, N0)


# --------------------------------------------------------------------------
# Deterministic parameter construction
# --------------------------------------------------------------------------

def conv_bn_params(key, cin, cout, bn=True, eps=1e-5):
    k1, k2, k3, k4 = jax.random.split(key, 4)
    W = jax.random.normal(k1, (cin, cout), jnp.float32) / math.sqrt(cin)
    b = 0.05 * jax.random.normal(k2, (cout,), jnp.float32)
    if bn:
        gamma = 1.0 + 0.1 * jax.random.normal(k3, (cout,), jnp.float32)
        beta = 0.1 * jax.random.normal(k4, (cout,), jnp.float32)
        scale = gamma / jnp.sqrt(jnp.ones((cout,), jnp.float32) + eps)
        shift = beta
    else:
        scale = jnp.ones((cout,), jnp.float32)
        shift = jnp.zeros((cout,), jnp.float32)
    return {"W": W, "b": b, "scale": scale, "shift": shift}


def att_params(key, cin, cout):
    k1, k2 = jax.random.split(key)
    wfc = jax.random.normal(k1, (cin, cin), jnp.float32) / math.sqrt(cin)
    mlp = conv_bn_params(k2, cin, cout)
    return {"Wfc": wfc, "W": mlp["W"], "b": mlp["b"],
            "scale": mlp["scale"], "shift": mlp["shift"]}


def make_params(key, cfg):
    keys = iter(jax.random.split(key, 64))
    params = {}
    kW, kb = jax.random.split(next(keys))
    params["fc0"] = {
        "W": jax.random.normal(kW, (6, 8), jnp.float32) / math.sqrt(6.0),
        "b": 0.05 * jax.random.normal(kb, (8,), jnp.float32),
        # BatchNorm1d(8, eps=1e-6), weight=1, bias=0, running stats (0, 1)
        "bn_scale": jnp.ones((8,), jnp.float32) / jnp.sqrt(1.0 + 1e-6),
        "bn_shift": jnp.zeros((8,), jnp.float32),
    }
    d_in = 8
    drb = []
    for i in range(cfg["num_layers"]):
        d_out = cfg["d_out"][i]
        drb.append({
            "mlp1": conv_bn_params(next(keys), d_in, d_out // 2),
            "lfa": {
                "mlp1": conv_bn_params(next(keys), 10, d_out // 2),
                "att1": att_params(next(keys), d_out, d_out // 2),
                "mlp2": conv_bn_params(next(keys), d_out // 2, d_out // 2),
                "att2": att_params(next(keys), d_out, d_out),
            },
            "mlp2": conv_bn_params(next(keys), d_out, 2 * d_out),
            "shortcut": conv_bn_params(next(keys), d_in, 2 * d_out),
        })
        d_in = 2 * d_out
    params["drb"] = drb
    d_out = d_in
    params["decoder_0"] = conv_bn_params(next(keys), d_in, d_out)
    dec = []
    for j in range(cfg["num_layers"]):
        if j < cfg["num_layers"] - 1:
            d_in = d_out + 2 * cfg["d_out"][-j - 2]
            d_out = 2 * cfg["d_out"][-j - 2]
        else:
            d_in = 4 * cfg["d_out"][0]
            d_out = 2 * cfg["d_out"][0]
        dec.append(conv_bn_params(next(keys), d_in, d_out))
    params["dec"] = dec
    params["fc1"] = conv_bn_params(next(keys), d_out, 64)
    params["fc2"] = conv_bn_params(next(keys), 64, 32)
    params["fc3"] = conv_bn_params(next(keys), 32, cfg["num_classes"], bn=False)
    return params


# --------------------------------------------------------------------------
# Main
# --------------------------------------------------------------------------

if __name__ == "__main__":
    key = jax.random.PRNGKey(0)
    cfg = {"num_layers": 2, "d_out": [16, 32], "num_classes": 5}
    B, N0, K = 2, 32, 8
    Ns = [N0, N0 // 2, N0 // 4]               # point counts per encoder level

    ks = jax.random.split(key, 16)
    params = make_params(ks[0], cfg)
    end_points = {
        "features": jax.random.normal(ks[1], (B, N0, 6), jnp.float32),
        "xyz": [jax.random.normal(ks[2 + i], (B, Ns[i], 3), jnp.float32)
                for i in range(cfg["num_layers"])],
        "neigh_idx": [jax.random.randint(ks[5 + i], (B, Ns[i], K), 0, Ns[i],
                                         dtype=jnp.int32)
                      for i in range(cfg["num_layers"])],
        "sub_idx": [jax.random.randint(ks[8 + i], (B, Ns[i + 1], K), 0, Ns[i],
                                       dtype=jnp.int32)
                    for i in range(cfg["num_layers"])],
        "interp_idx": [jax.random.randint(ks[11 + i], (B, Ns[i], 1), 0,
                                          Ns[i + 1], dtype=jnp.int32)
                       for i in range(cfg["num_layers"])],
    }

    logits = network_forward(params, cfg, end_points)
    logits = jax.block_until_ready(logits)
    assert logits.shape == (B, cfg["num_classes"], N0)
    assert bool(jnp.all(jnp.isfinite(logits)))
    print("KERNEL_OK")
</pallas_src>

<mosaic_0001>
module attributes {stable_mosaic.version = 11 : i64} {
  func.func @_pointwise_kernel(%arg0: i32, %arg1: memref<32x6xf32, #tpu.memory_space<vmem>>, %arg2: memref<6x8xbf16, #tpu.memory_space<vmem>>, %arg3: memref<1x8xf32, #tpu.memory_space<vmem>>, %arg4: memref<1x8xf32, #tpu.memory_space<vmem>>, %arg5: memref<1x8xf32, #tpu.memory_space<vmem>>, %arg6: memref<32x8xbf16, #tpu.memory_space<vmem>>) attributes {dimension_semantics = [#tpu.dimension_semantics<parallel>], iteration_bounds = array<i64: 2>, scalar_prefetch = 0 : i64, scratch_operands = 0 : i64, tpu.core_type = #tpu.core_type<tc>, window_params = [{transform_indices = @transform_0, window_bounds = array<i64: 32, 6>}, {pipeline_mode = #tpu.pipeline_mode<synchronous>, transform_indices = @transform_1, window_bounds = array<i64: 6, 8>}, {pipeline_mode = #tpu.pipeline_mode<synchronous>, transform_indices = @transform_2, window_bounds = array<i64: 1, 8>}, {pipeline_mode = #tpu.pipeline_mode<synchronous>, transform_indices = @transform_3, window_bounds = array<i64: 1, 8>}, {pipeline_mode = #tpu.pipeline_mode<synchronous>, transform_indices = @transform_4, window_bounds = array<i64: 1, 8>}, {transform_indices = @transform_5, window_bounds = array<i64: 32, 8>}]} {
    %c0 = arith.constant 0 : index
    %c0_0 = arith.constant 0 : index
    %0 = vector.load %arg1[%c0, %c0_0] : memref<32x6xf32, #tpu.memory_space<vmem>>, vector<32x6xf32>
    %1 = arith.truncf %0 : vector<32x6xf32> to vector<32x6xbf16>
    %c0_1 = arith.constant 0 : index
    %c0_2 = arith.constant 0 : index
    %2 = vector.load %arg2[%c0_1, %c0_2] : memref<6x8xbf16, #tpu.memory_space<vmem>>, vector<6x8xbf16>
    %cst = arith.constant dense<0.000000e+00> : vector<32x8xf32>
    %3 = tpu.matmul %1, %2, %cst {dimension_numbers = #tpu.dot_dimension_numbers<[1], [0], [0], [1], [0, 0, 1, 1], [], []>} : vector<32x6xbf16>, vector<6x8xbf16>, vector<32x8xf32> -> vector<32x8xf32>
    %c0_3 = arith.constant 0 : index
    %c0_4 = arith.constant 0 : index
    %4 = vector.load %arg3[%c0_3, %c0_4] : memref<1x8xf32, #tpu.memory_space<vmem>>, vector<1x8xf32>
    %5 = vector.broadcast %4 : vector<1x8xf32> to vector<32x8xf32>
    %6 = arith.addf %3, %5 : vector<32x8xf32>
    %cst_5 = arith.constant 0.000000e+00 : f32
    %7 = vector.broadcast %cst_5 : f32 to vector<32x8xf32>
    %8 = arith.cmpf ogt, %6, %7 : vector<32x8xf32>
    %cst_6 = arith.constant 0.00999999977 : f32
    %9 = vector.broadcast %cst_6 : f32 to vector<32x8xf32>
    %10 = arith.mulf %9, %6 : vector<32x8xf32>
    %11 = arith.select %8, %6, %10 : vector<32x8xi1>, vector<32x8xf32>
    %c0_7 = arith.constant 0 : index
    %c0_8 = arith.constant 0 : index
    %12 = vector.load %arg4[%c0_7, %c0_8] : memref<1x8xf32, #tpu.memory_space<vmem>>, vector<1x8xf32>
    %13 = vector.broadcast %12 : vector<1x8xf32> to vector<32x8xf32>
    %14 = arith.mulf %11, %13 : vector<32x8xf32>
    %c0_9 = arith.constant 0 : index
    %c0_10 = arith.constant 0 : index
    %15 = vector.load %arg5[%c0_9, %c0_10] : memref<1x8xf32, #tpu.memory_space<vmem>>, vector<1x8xf32>
    %16 = vector.broadcast %15 : vector<1x8xf32> to vector<32x8xf32>
    %17 = arith.addf %14, %16 : vector<32x8xf32>
    %18 = arith.truncf %17 : vector<32x8xf32> to vector<32x8xbf16>
    %c0_11 = arith.constant 0 : index
    %c0_12 = arith.constant 0 : index
    %19 = vector.load %arg6[%c0_11, %c0_12] : memref<32x8xbf16, #tpu.memory_space<vmem>>, vector<32x8xbf16>
    tpu.vector_store %arg6[%c0_11, %c0_12], %18 {strides = array<i32>} : memref<32x8xbf16, #tpu.memory_space<vmem>>, vector<32x8xbf16>,
    return
  }
  func.func @transform_0(%arg0: i32) -> (i32, i32) {
    %c0_i32 = arith.constant 0 : i32
    %c0_i32_0 = arith.constant 0 : i32
    return %arg0, %c0_i32 : i32, i32
  }
  func.func @transform_1(%arg0: i32) -> (i32, i32) {
    %c0_i32 = arith.constant 0 : i32
    %c0_i32_0 = arith.constant 0 : i32
    %c0_i32_1 = arith.constant 0 : i32
    return %c0_i32, %c0_i32_0 : i32, i32
  }
  func.func @transform_2(%arg0: i32) -> (i32, i32) {
    %c0_i32 = arith.constant 0 : i32
    %c0_i32_0 = arith.constant 0 : i32
    %c0_i32_1 = arith.constant 0 : i32
    return %c0_i32, %c0_i32_0 : i32, i32
  }
  func.func @transform_3(%arg0: i32) -> (i32, i32) {
    %c0_i32 = arith.constant 0 : i32
    %c0_i32_0 = arith.constant 0 : i32
    %c0_i32_1 = arith.constant 0 : i32
    return %c0_i32, %c0_i32_0 : i32, i32
  }
  func.func @transform_4(%arg0: i32) -> (i32, i32) {
    %c0_i32 = arith.constant 0 : i32
    %c0_i32_0 = arith.constant 0 : i32
    %c0_i32_1 = arith.constant 0 : i32
    return %c0_i32, %c0_i32_0 : i32, i32
  }
  func.func @transform_5(%arg0: i32) -> (i32, i32) {
    %c0_i32 = arith.constant 0 : i32
    %c0_i32_0 = arith.constant 0 : i32
    return %arg0, %c0_i32 : i32, i32
  }
}

</mosaic_0001>

<llo_original>
// kernel: tpu_custom_call.1
$region0: #{tpu_custom_call.1}
  #allocation0 [shape = 'u32[]', space=smem, size = 0x4, offset = 0x4, fixed_abs, tag = 'smem constant byte address 0x4 - core index']
  #allocation1 [shape = 'u32[144,128]{1,0:T(1,128)}', space=vmem, size = 0x12000, scoped, tag = 'internal scratch']
  %s0 = inlined_call_operand.vmem [shape: f32[64,6], index: 0, kind: input, shape index: {}]
  %s1 = inlined_call_operand.vmem [shape: bf16[6,8], index: 1, kind: input, shape index: {}]
  %s2 = inlined_call_operand.vmem [shape: f32[1,8], index: 2, kind: input, shape index: {}]
  %s3 = inlined_call_operand.vmem [shape: f32[1,8], index: 3, kind: input, shape index: {}]
  %s4 = inlined_call_operand.vmem [shape: f32[1,8], index: 4, kind: input, shape index: {}]
  %s5 = inlined_call_operand.vmem [shape: bf16[64,8], index: 5, kind: output, shape index: {}]
  %s6 = sld [smem:[#allocation0]]
  $region53: #{tpu_custom_call.1} parent=0
    _
  %s8 = ssub.s32 1, %s6
  %s9 = scalar_select 0, %s8, %s6
  loop: start=0, step=1, limit=4
  $region2: #{tpu_custom_call.1} parent=0 // loop_pre_header
    _
  $region3: #{tpu_custom_call.1} parent=0 // loop_header
    %s11 = sphi 0, %s15
    %p12 = scmp.ge.s32.totalorder %s11, 4
    %s21 = sphi 0, %s23
    %s24 = sphi 0, %s21
    %s25 = sphi 0, %s24
    %s41 = sphi 0, %s25
    %s45 = sphi 0, %s45
    %s47 = sphi 0, %s45
    %s48 = sphi 0, %s47
    %s62 = sphi 0, %s48
    %s66 = sphi 0, %s66
    %s68 = sphi 0, %s66
    %s69 = sphi 0, %s68
    %s83 = sphi 0, %s69
    %s87 = sphi 0, %s87
    %s89 = sphi 0, %s87
    %s90 = sphi 0, %s89
    %s104 = sphi 0, %s90
    %s108 = sphi 0, %s108
    %s110 = sphi 0, %s108
    %s111 = sphi 0, %s110
    %s125 = sphi 0, %s111
    %s131 = sphi 0, %s133
    %s134 = sphi 0, %s131
    %s135 = sphi 0, %s134
    %s151 = sphi 0, %s135
  $region4: #{tpu_custom_call.1} parent=0 // loop_header_branch
    %14 = sbr.rel (%p12) target = $region8
  $region5: #{tpu_custom_call.1} parent=0 // loop_body
    %s16 = ssub.s32 %s11, 1
    %s17 = ssub.s32 %s11, 2
    %s18 = sadd.s32 %s11, 1
    %s19 = ssub.s32 %s11, %s18
    %p20 = scmp.eq.s32.totalorder %s19, 0
    %s22 = sadd.s32 %s21, 1
    %s23 = scalar_select %p20, %s21, %s22
    %p26 = pneg %p20
    %p27 = scmp.eq.s32.totalorder %s11, 1
    %p28 = por %p26, %p27
    %p29 = scmp.ne.s32.totalorder %s21, %s24
    %p30 = scmp.eq.s32.totalorder %s11, 0
    %p31 = por %p29, %p30
    %p32 = scmp.ne.s32.totalorder %s21, %s24
    %p33 = scmp.eq.s32.totalorder %s16, 1
    %p34 = por %p32, %p33
    %p35 = scmp.ne.s32.totalorder %s24, %s25
    %p36 = scmp.eq.s32.totalorder %s16, 0
    %p37 = por %p35, %p36
    %p38 = scmp.ne.s32.totalorder %s24, %s25
    %p39 = scmp.eq.s32.totalorder %s17, 1
    %p40 = por %p38, %p39
    %p42 = scmp.ne.s32.totalorder %s25, %s41
    %p43 = scmp.eq.s32.totalorder %s17, 0
    %p44 = por %p42, %p43
    %s46 = sadd.s32 %s45, 1
    %p49 = scmp.eq.s32.totalorder %s11, 1
    %p50 = scmp.ne.s32.totalorder %s45, %s47
    %p51 = scmp.eq.s32.totalorder %s11, 0
    %p52 = por %p50, %p51
    %p53 = scmp.ne.s32.totalorder %s45, %s47
    %p54 = scmp.eq.s32.totalorder %s16, 1
    %p55 = por %p53, %p54
    %p56 = scmp.ne.s32.totalorder %s47, %s48
    %p57 = scmp.eq.s32.totalorder %s16, 0
    %p58 = por %p56, %p57
    %p59 = scmp.ne.s32.totalorder %s47, %s48
    %p60 = scmp.eq.s32.totalorder %s17, 1
    %p61 = por %p59, %p60
    %p63 = scmp.ne.s32.totalorder %s48, %s62
    %p64 = scmp.eq.s32.totalorder %s17, 0
    %p65 = por %p63, %p64
    %s67 = sadd.s32 %s66, 1
    %p70 = scmp.eq.s32.totalorder %s11, 1
    %p71 = scmp.ne.s32.totalorder %s66, %s68
    %p72 = scmp.eq.s32.totalorder %s11, 0
    %p73 = por %p71, %p72
    %p74 = scmp.ne.s32.totalorder %s66, %s68
    %p75 = scmp.eq.s32.totalorder %s16, 1
    %p76 = por %p74, %p75
    %p77 = scmp.ne.s32.totalorder %s68, %s69
    %p78 = scmp.eq.s32.totalorder %s16, 0
    %p79 = por %p77, %p78
    %p80 = scmp.ne.s32.totalorder %s68, %s69
    %p81 = scmp.eq.s32.totalorder %s17, 1
    %p82 = por %p80, %p81
    %p84 = scmp.ne.s32.totalorder %s69, %s83
    %p85 = scmp.eq.s32.totalorder %s17, 0
    %p86 = por %p84, %p85
    %s88 = sadd.s32 %s87, 1
    %p91 = scmp.eq.s32.totalorder %s11, 1
    %p92 = scmp.ne.s32.totalorder %s87, %s89
    %p93 = scmp.eq.s32.totalorder %s11, 0
    %p94 = por %p92, %p93
    %p95 = scmp.ne.s32.totalorder %s87, %s89
    %p96 = scmp.eq.s32.totalorder %s16, 1
    %p97 = por %p95, %p96
    %p98 = scmp.ne.s32.totalorder %s89, %s90
    %p99 = scmp.eq.s32.totalorder %s16, 0
    %p100 = por %p98, %p99
    %p101 = scmp.ne.s32.totalorder %s89, %s90
    %p102 = scmp.eq.s32.totalorder %s17, 1
    %p103 = por %p101, %p102
    %p105 = scmp.ne.s32.totalorder %s90, %s104
    %p106 = scmp.eq.s32.totalorder %s17, 0
    %p107 = por %p105, %p106
    %s109 = sadd.s32 %s108, 1
    %p112 = scmp.eq.s32.totalorder %s11, 1
    %p113 = scmp.ne.s32.totalorder %s108, %s110
    %p114 = scmp.eq.s32.totalorder %s11, 0
    %p115 = por %p113, %p114
    %p116 = scmp.ne.s32.totalorder %s108, %s110
    %p117 = scmp.eq.s32.totalorder %s16, 1
    %p118 = por %p116, %p117
    %p119 = scmp.ne.s32.totalorder %s110, %s111
    %p120 = scmp.eq.s32.totalorder %s16, 0
    %p121 = por %p119, %p120
    %p122 = scmp.ne.s32.totalorder %s110, %s111
    %p123 = scmp.eq.s32.totalorder %s17, 1
    %p124 = por %p122, %p123
    %p126 = scmp.ne.s32.totalorder %s111, %s125
    %p127 = scmp.eq.s32.totalorder %s17, 0
    %p128 = por %p126, %p127
    %s129 = ssub.s32 %s11, %s18
    %p130 = scmp.eq.s32.totalorder %s129, 0
    %s132 = sadd.s32 %s131, 1
    %s133 = scalar_select %p130, %s131, %s132
    %p136 = pneg %p130
    %p137 = scmp.eq.s32.totalorder %s11, 1
    %p138 = por %p136, %p137
    %p139 = scmp.ne.s32.totalorder %s131, %s134
    %p140 = scmp.eq.s32.totalorder %s11, 0
    %p141 = por %p139, %p140
    %p142 = scmp.ne.s32.totalorder %s131, %s134
    %p143 = scmp.eq.s32.totalorder %s16, 1
    %p144 = por %p142, %p143
    %p145 = scmp.ne.s32.totalorder %s134, %s135
    %p146 = scmp.eq.s32.totalorder %s16, 0
    %p147 = por %p145, %p146
    %p148 = scmp.ne.s32.totalorder %s134, %s135
    %p149 = scmp.eq.s32.totalorder %s17, 1
    %p150 = por %p148, %p149
    %p152 = scmp.ne.s32.totalorder %s135, %s151
    %p153 = scmp.eq.s32.totalorder %s17, 0
    %p154 = por %p152, %p153
    %p155 = scmp.le.s32.totalorder 1, %s11
    %p156 = scmp.lt.s32.totalorder %s11, 3
    %p157 = pnand %p155, %p156
    %p158 = pneg %p157
    // Predicated region
    $region9: #{tpu_custom_call.1} parent=5 // pred_check
      _
    $region10: #{tpu_custom_call.1} parent=5 // pred_check_branch
      %160 = sbr.rel (%p157) target = $region12
    $region11: #{tpu_custom_call.1} parent=5 // pred_region
      %s161 = ssub.s32 %s11, 1
      // Predicated region
      $region13: #{tpu_custom_call.1} parent=11 // pred_check
        %p162 = pneg %p58
      $region14: #{tpu_custom_call.1} parent=11 // pred_check_branch
        %164 = sbr.rel (%p162) target = $region16
      $region15: #{tpu_custom_call.1} parent=11 // pred_region
        _
      $region16: #{tpu_custom_call.1} parent=11 // pred_fallthru
        _
      // Predicated region
      $region17: #{tpu_custom_call.1} parent=11 // pred_check
        %p165 = pneg %p79
      $region18: #{tpu_custom_call.1} parent=11 // pred_check_branch
        %167 = sbr.rel (%p165) target = $region20
      $region19: #{tpu_custom_call.1} parent=11 // pred_region
        _
      $region20: #{tpu_custom_call.1} parent=11 // pred_fallthru
        _
      // Predicated region
      $region21: #{tpu_custom_call.1} parent=11 // pred_check
        %p168 = pneg %p100
      $region22: #{tpu_custom_call.1} parent=11 // pred_check_branch
        %170 = sbr.rel (%p168) target = $region24
      $region23: #{tpu_custom_call.1} parent=11 // pred_region
        _
      $region24: #{tpu_custom_call.1} parent=11 // pred_fallthru
        _
      // Predicated region
      $region25: #{tpu_custom_call.1} parent=11 // pred_check
        %p171 = pneg %p121
      $region26: #{tpu_custom_call.1} parent=11 // pred_check_branch
        %173 = sbr.rel (%p171) target = $region28
      $region27: #{tpu_custom_call.1} parent=11 // pred_region
        _
      $region28: #{tpu_custom_call.1} parent=11 // pred_fallthru
        _
    $region12: #{tpu_custom_call.1} parent=5 // pred_fallthru
      _
    %p174 = scmp.lt.s32.totalorder %s11, 2
    // Predicated region
    $region29: #{tpu_custom_call.1} parent=5 // pred_check
      %p175 = pneg %p174
    $region30: #{tpu_custom_call.1} parent=5 // pred_check_branch
      %177 = sbr.rel (%p175) target = $region32
    $region31: #{tpu_custom_call.1} parent=5 // pred_region
      // Predicated region
      $region33: #{tpu_custom_call.1} parent=31 // pred_check
        %p178 = pneg %p31
      $region34: #{tpu_custom_call.1} parent=31 // pred_check_branch
        %180 = sbr.rel (%p178) target = $region36
      $region35: #{tpu_custom_call.1} parent=31 // pred_region
        %s181 = smul.u32 4, %s11
        %p182 = scmp.lt.s32.totalorder %s181, 7
        %s183 = scalar_select %p182, %s181, 7
        %s184 = smul.addr %s183, 8
        %s185 = scalar_lea.vmem %s0, %s184
        %s186 = smul.u32 4, %s11
      $region36: #{tpu_custom_call.1} parent=31 // pred_fallthru
        _
    $region32: #{tpu_custom_call.1} parent=5 // pred_fallthru
      _
    %p187 = scmp.le.s32.totalorder 1, %s11
    %p188 = scmp.lt.s32.totalorder %s11, 3
    %p189 = pnand %p187, %p188
    %p190 = pneg %p189
    // Predicated region
    $region37: #{tpu_custom_call.1} parent=5 // pred_check
      _
    $region38: #{tpu_custom_call.1} parent=5 // pred_check_branch
      %192 = sbr.rel (%p189) target = $region40
    $region39: #{tpu_custom_call.1} parent=5 // pred_region
      %s193 = ssub.s32 %s11, 1
      %s194 = smul.u32 4, %s16
      %p195 = scmp.lt.s32.totalorder %s194, 7
      %s196 = scalar_select %p195, %s194, 7
      %s197 = smul.addr %s196, 8
      %s198 = scalar_lea.vmem %s0, %s197
      %p199 = pneg %p37
      %p200 = pneg %p34
      %p201 = pneg %p58
      %p202 = pneg %p55
      %p203 = pneg %p79
      %p204 = pneg %p76
      %p205 = pneg %p100
      %p206 = pneg %p97
      %p207 = pneg %p121
      %p208 = pneg %p118
      %p209 = pneg %p147
      %p210 = pneg %p144
      %s211 = smul.u32 4, %s16
      %p212 = scmp.lt.s32.totalorder %s211, 7
      %s213 = scalar_select %p212, %s211, 7
      %s214 = smul.addr %s213, 4
      %s215 = scalar_lea.vmem %s5, %s214
      %s216 = smul.u32 4, %s16
      %p217 = scmp.lt.s32.totalorder %s216, 7
      %s218 = scalar_select %p217, %s216, 7
      %s219 = smul.addr %s218, 8
      %s220 = scalar_lea.vmem %s0, %s219
      %s221 = smul.u32 4, %s16
      %s222 = smul.u32 4, %s16
      %p223 = scmp.lt.s32.totalorder %s222, 7
      %s224 = scalar_select %p223, %s222, 7
      %s225 = smul.addr %s224, 4
      %s226 = scalar_lea.vmem %s5, %s225
      %s227 = smul.u32 4, %s16
      %v229 = vld [vmem:[%s220] sm:$0xff]
      %v230 = vld [vmem:[%s220 + $0x8] sm:$0xff]
      %v231 = vld [vmem:[%s220 + $0x10] sm:$0xff]
      %v232 = vld [vmem:[%s220 + $0x18] sm:$0xff]
      %v233 = vpack.c.bf16 %v230, %v229
      %v234 = vpack.c.bf16 %v232, %v231
      %v235 = vld [vmem:[%s1] sm:$0x7]
      %v236 = vld [vmem:[%s2] sm:$0x1]
      %v238 = vlaneseq
      %v239 = vshrl.u32 %v238, 7
      %v240 = vsub.s32 0, %v239
      %v241 = vrot.slane %v236, %v240
      %vm243 = vcmask 48128
      %v245 = vsel %vm243, %v233, 0
      %v248 = vsel %vm243, %v234, 0
      %vm250 = vcmask 1042432
      %v252 = vsel %vm250, %v235, 0
      %254 = vmatprep.subr.bf16.mxu0 0
      %255 = vmatpush1.bf16.msra.mxu0 0
      %256 = vmatprep.subr.bf16.mxu0 0
      %257 = vmatpush1.bf16.msra.mxu0 0
      %258 = vmatprep.subr.bf16.mxu0 0
      %259 = vmatpush1.bf16.msra.mxu0 0
      %260 = vmatprep.subr.bf16.mxu0 0
      %261 = vmatpush1.bf16.msra.mxu0 0
      %262 = vmatprep.subr.bf16.mxu0 0
      %263 = vmatpush1.bf16.msra.mxu0 0
      %264 = vmatprep.subr.bf16.mxu0 0
      %265 = vmatpush1.bf16.msra.mxu0 0
      %266 = vmatprep.subr.bf16.mxu0 0
      %267 = vmatpush1.bf16.msra.mxu0 0
      %268 = vmatprep.subr.bf16.mxu0 0
      %269 = vmatpush1.bf16.msra.mxu0 %v252
      %270 = vmatprep.subr.bf16.mxu0 0
      %271 = vmatpush2.bf16.msra.mxu0 0
      %272 = vmatprep.subr.bf16.mxu0 0
      %273 = vmatpush2.bf16.msra.mxu0 0
      %274 = vmatprep.subr.bf16.mxu0 0
      %275 = vmatpush2.bf16.msra.mxu0 0
      %276 = vmatprep.subr.bf16.mxu0 0
      %277 = vmatpush2.bf16.msra.mxu0 0
      %278 = vmatprep.subr.bf16.mxu0 0
      %279 = vmatpush2.bf16.msra.mxu0 0
      %280 = vmatprep.subr.bf16.mxu0 0
      %281 = vmatpush2.bf16.msra.mxu0 0
      %282 = vmatprep.subr.bf16.mxu0 0
      %283 = vmatpush2.bf16.msra.mxu0 0
      %284 = vmatprep.subr.bf16.mxu0 0
      %285 = vmatpush2.bf16.msra.mxu0 0
      %286 = vmatprep.mubr.bf16.mxu0 0
      %287 = vmatmul.mubr.bf16.gmra.mxu0 %v245
      %v288 = vpop.f32.mrf.mxu0
      %v289 = vadd.f32 %v241, %v288
      %v290 = vpop.f32.mrf.mxu0
      %v291 = vpop.f32.mrf.mxu0
      %v292 = vadd.f32 %v241, %v291
      %v293 = vpop.f32.mrf.mxu0
      %294 = vmatprep.mubr.bf16.mxu0 0
      %295 = vmatmul.mubr.bf16.gmra.mxu0 %v248
      %v296 = vpop.f32.mrf.mxu0
      %v297 = vadd.f32 %v241, %v296
      %v298 = vpop.f32.mrf.mxu0
      %v299 = vpop.f32.mrf.mxu0
      %v300 = vadd.f32 %v241, %v299
      %v301 = vpop.f32.mrf.mxu0
      %302 = vdwg.mxu0
      %vm303 = vcmp.gt.f32.partialorder %v289, 0.0
      %vm304 = vcmp.gt.f32.partialorder %v292, 0.0
      %vm305 = vcmp.gt.f32.partialorder %v297, 0.0
      %vm306 = vcmp.gt.f32.partialorder %v300, 0.0
      %v307 = vmul.f32 %v289, 0.01
      %v308 = vmul.f32 %v292, 0.01
      %v309 = vmul.f32 %v297, 0.01
      %v310 = vmul.f32 %v300, 0.01
      %v311 = vsel %vm303, %v289, %v307
      %v312 = vsel %vm304, %v292, %v308
      %v313 = vsel %vm305, %v297, %v309
      %v314 = vsel %vm306, %v300, %v310
      %v315 = vld [vmem:[%s3] sm:$0x1]
      %v317 = vlaneseq
      %v318 = vshrl.u32 %v317, 7
      %v319 = vsub.s32 0, %v318
      %v320 = vrot.slane %v315, %v319
      %v322 = vmul.f32 %v311, %v320
      %v323 = vmul.f32 %v312, %v320
      %v324 = vmul.f32 %v313, %v320
      %v325 = vmul.f32 %v314, %v320
      %v326 = vld [vmem:[%s4] sm:$0x1]
      %v328 = vlaneseq
      %v329 = vshrl.u32 %v328, 7
      %v330 = vsub.s32 0, %v329
      %v331 = vrot.slane %v326, %v330
      %v333 = vadd.f32 %v322, %v331
      %v334 = vadd.f32 %v323, %v331
      %v335 = vadd.f32 %v324, %v331
      %v336 = vadd.f32 %v325, %v331
      %v337 = vpack.c.bf16 %v334, %v333
      %v338 = vpack.c.bf16 %v336, %v335
      %v341 = vunpack.c.l.b16 %v337
      %v342 = vunpack.c.h.b16 %v337
      %v343 = vunpack.c.l.b16 %v338
      %v344 = vunpack.c.h.b16 %v338
      %v345 = vpack.c.b16 %v341, %v341
      %v346 = vpack.c.b16 %v342, %v342
      %v347 = vpack.c.b16 %v343, %v343
      %v348 = vpack.c.b16 %v344, %v344
      %vm353 = vcmask 60416
      %354 = vst.msk [vmem:[%s226] sm:$0xf] %vm353, %v345
      %355 = vst.msk [vmem:[%s226 + $0x4] sm:$0xf] %vm353, %v346
      %356 = vst.msk [vmem:[%s226 + $0x8] sm:$0xf] %vm353, %v347
      %357 = vst.msk [vmem:[%s226 + $0xc] sm:$0xf] %vm353, %v348
      %s358 = smul.u32 4, %s16
      %p359 = scmp.lt.s32.totalorder %s358, 7
      %s360 = scalar_select %p359, %s358, 7
      %s361 = smul.addr %s360, 4
      %s362 = scalar_lea.vmem %s5, %s361
      // Predicated region
      $region41: #{tpu_custom_call.1} parent=39 // pred_check
        %p363 = pneg %p144
      $region42: #{tpu_custom_call.1} parent=39 // pred_check_branch
        %365 = sbr.rel (%p363) target = $region44
      $region43: #{tpu_custom_call.1} parent=39 // pred_region
        %s366 = smul.u32 4, %s16
      $region44: #{tpu_custom_call.1} parent=39 // pred_fallthru
        _
    $region40: #{tpu_custom_call.1} parent=5 // pred_fallthru
      _
    %p367 = scmp.le.s32.totalorder 2, %s11
    // Predicated region
    $region45: #{tpu_custom_call.1} parent=5 // pred_check
      %p368 = pneg %p367
    $region46: #{tpu_custom_call.1} parent=5 // pred_check_branch
      %370 = sbr.rel (%p368) target = $region48
    $region47: #{tpu_custom_call.1} parent=5 // pred_region
      %s371 = ssub.s32 %s11, 2
      // Predicated region
      $region49: #{tpu_custom_call.1} parent=47 // pred_check
        %p372 = pneg %p150
      $region50: #{tpu_custom_call.1} parent=47 // pred_check_branch
        %374 = sbr.rel (%p372) target = $region52
      $region51: #{tpu_custom_call.1} parent=47 // pred_region
        %s375 = smul.u32 4, %s17
        %p376 = scmp.lt.s32.totalorder %s375, 7
        %s377 = scalar_select %p376, %s375, 7
        %s378 = smul.addr %s377, 4
        %s379 = scalar_lea.vmem %s5, %s378
      $region52: #{tpu_custom_call.1} parent=47 // pred_fallthru
        _
    $region48: #{tpu_custom_call.1} parent=5 // pred_fallthru
      _
  $region6: #{tpu_custom_call.1} parent=0 // loop_footer
    %s15 = sadd.s32 1, %s11
  $region7: #{tpu_custom_call.1} parent=0 // loop_footer_branch
    %10 = sbr.rel target = $region3
  $region8: #{tpu_custom_call.1} parent=0 // loop_exit
    _

</llo_original>
